<compile_context>
chip_gen: v7x
topology: tpu7x:2x2x1
jax: 0.10.0
libtpu: 0.0.40
codegen_flags: <defaults>
</compile_context>

<pallas_src>
import functools

import jax
import jax.numpy as jnp
from jax.experimental import pallas as pl
from jax.experimental.pallas import tpu as pltpu

HEAD_N = 128  # fused-head / output-slab lane width (multiple of 128 -> unmasked stores)


def _round_up(x, m):
    return ((x + m - 1) // m) * m


def _choose_tb(B, tile_b):
    """Pick the batch tile: multiple of 128 for big B (MXU M dim), multiple of
    16 for small B (bf16 vreg packing), clamped to ~B; prefer >=2 grid steps
    for v7x's two TensorCores when the batch allows it."""
    tile_b = max(16, int(tile_b))
    if B <= 128:
        return min(_round_up(B, 16), _round_up(tile_b, 16))
    tb = min(_round_up(tile_b, 128), _round_up(B, 128))
    if _round_up(B, tb) // tb < 2 and tb >= 256:
        tb = _round_up(tb // 2, 128)
    return tb


def actors_critic_kernel(obs_ref, w1_ref, b1_ref, w2_ref, b2_ref,
                         wh_ref, bh_ref, std_ref, noise_ref, out_ref,
                         *, action_dim):
    A = action_dim
    x = obs_ref[...]                                                      # [TB, S] bf16

    # ---- trunk: two Linear + ReLU layers (bf16 MXU matmuls, f32 accumulation) ----
    h1 = jnp.dot(x, w1_ref[...], preferred_element_type=jnp.float32) + b1_ref[...]
    h1 = jnp.maximum(h1, 0.0)                                             # [TB, U] f32
    h2 = jnp.dot(h1.astype(jnp.bfloat16), w2_ref[...],
                 preferred_element_type=jnp.float32) + b2_ref[...]
    h2 = jnp.maximum(h2, 0.0)                                             # [TB, U] f32

    # ---- fused heads: cols [0:A)=logits, [A:2A)=mu, 2A=state_value, 2A+2=lpc ----
    head = jnp.dot(h2.astype(jnp.bfloat16), wh_ref[...],
                   preferred_element_type=jnp.float32) + bh_ref[...]      # [TB, 128]

    noise = noise_ref[...]                 # gumbel in cols [0,A), eps in [A,2A), else 0
    col = jax.lax.broadcasted_iota(jnp.int32, head.shape, 1)
    NEG = jnp.float32(-1e30)

    # ---- discrete actor head: masked 128-wide log-softmax + Gumbel-max sample ----
    logit_mask = col < A
    logits = jnp.where(logit_mask, head, NEG)
    m = jnp.max(logits, axis=-1, keepdims=True)
    z = logits - m
    log_probs = z - jnp.log(jnp.sum(jnp.exp(z), axis=-1, keepdims=True))  # masked cols ~ -1e30
    scores = log_probs + noise             # masked cols stay ~ -1e30 even with eps added
    smax = jnp.max(scores, axis=-1, keepdims=True)
    cand = jnp.where(scores >= smax, col, jnp.int32(head.shape[-1]))
    a_col = jnp.min(cand, axis=-1, keepdims=True)                         # argmax col == action id
    a_lp = jnp.sum(jnp.where(col == a_col, log_probs, 0.0),
                   axis=-1, keepdims=True)                                # [TB, 1]

    # ---- continuous parameter head: diag-cov Gaussian (mu in cols [A,2A)) ----
    mu_mask = jnp.logical_and(col >= A, col < 2 * A)
    sample = jnp.where(mu_mask, head + std_ref[...] * noise, 0.0)         # sample in cols [A,2A)
    eps_sq = jnp.where(mu_mask, noise * noise, 0.0)
    lpc = jnp.sum(jnp.where(col == 2 * A + 2, head, 0.0),
                  axis=-1, keepdims=True)                                 # folded log-prob constant
    p_lp = lpc - 0.5 * jnp.sum(eps_sq, axis=-1, keepdims=True)            # [TB, 1]

    # ---- critic head: state value sits at column 2A of `head` ----
    sv = jnp.sum(jnp.where(col == 2 * A, head, 0.0), axis=-1, keepdims=True)

    # ---- single lane-dense output slab ----
    # layout: [A:2A)=parameter, 2A=action, 2A+1=action_lp, 2A+2=param_lp, 2A+3=state_value
    slab = sample
    slab = jnp.where(col == 2 * A, a_col.astype(jnp.float32), slab)
    slab = jnp.where(col == 2 * A + 1, a_lp, slab)
    slab = jnp.where(col == 2 * A + 2, p_lp, slab)
    slab = jnp.where(col == 2 * A + 3, sv, slab)
    out_ref[...] = slab


def pack_params(params, parameters_var):
    """One-time packing: fuse head weights, pad to 128 lanes, bf16 heavy weights,
    fold the Gaussian log-prob constant into the head bias, precompute std."""
    (w1, b1, w2, b2, wa, ba, wp, bp, ws, bs) = params
    U = w1.shape[1]
    A = wa.shape[1]
    assert 2 * A + 4 <= HEAD_N

    wh = jnp.zeros((U, HEAD_N), jnp.float32)
    wh = wh.at[:, 0:A].set(wa).at[:, A:2 * A].set(wp).at[:, 2 * A:2 * A + 1].set(ws)

    var = parameters_var.reshape(1, A).astype(jnp.float32)
    lpc = -0.5 * (A * jnp.log(2.0 * jnp.pi) + jnp.sum(jnp.log(var)))      # scalar

    bh = jnp.zeros((1, HEAD_N), jnp.float32)
    bh = bh.at[:, 0:A].set(ba).at[:, A:2 * A].set(bp).at[:, 2 * A:2 * A + 1].set(bs)
    bh = bh.at[:, 2 * A + 2].set(lpc)     # wh column 2A+2 is zero -> head col == lpc

    std_w = jnp.zeros((1, HEAD_N), jnp.float32).at[:, A:2 * A].set(jnp.sqrt(var))

    return {
        "w1": w1.astype(jnp.bfloat16), "b1": b1.astype(jnp.float32),
        "w2": w2.astype(jnp.bfloat16), "b2": b2.astype(jnp.float32),
        "wh": wh.astype(jnp.bfloat16), "bh": bh,
        "std": std_w,
        "action_dim": A,
    }


def actors_critic_forward(obs, packed, gumbel, eps, *, tile_b=512):
    """Returns (action, action_log_prob, parameter, parameter_log_prob, state_value)."""
    B, S = obs.shape
    A = packed["action_dim"]
    w1, b1 = packed["w1"], packed["b1"]
    w2, b2 = packed["w2"], packed["b2"]
    wh, bh = packed["wh"], packed["bh"]
    std = packed["std"]
    U = w1.shape[1]

    TB = _choose_tb(B, tile_b)
    Bp = _round_up(B, TB)

    def pad_rows(x):
        return x if x.shape[0] == Bp else jnp.pad(x, ((0, Bp - x.shape[0]), (0, 0)))

    obs_p = pad_rows(obs.astype(jnp.bfloat16))
    # single merged lane-dense noise slab: gumbel in [0,A), eps in [A,2A)
    noise = jnp.zeros((B, HEAD_N), jnp.float32)
    noise = noise.at[:, 0:A].set(gumbel).at[:, A:2 * A].set(eps)
    noise_p = pad_rows(noise)

    grid = (Bp // TB,)

    def row_spec(feat):                      # per-batch-tile blocks (pipelined)
        return pl.BlockSpec((TB, feat), lambda i: (i, 0))

    def resident(a):                         # weights: same block every step -> VMEM-resident
        return pl.BlockSpec(a.shape, lambda i: (0, 0))

    flops = 2 * Bp * (S * U + U * U + U * HEAD_N)
    transcendentals = Bp * (HEAD_N + 1)      # 128-lane exp per row + 1 log per row
    bytes_accessed = int(
        obs_p.size * 2                       # bf16 obs
        + noise_p.size * 4                   # merged noise slab (f32)
        + Bp * HEAD_N * 4                    # output slab (f32)
        + (w1.size + w2.size + wh.size) * 2  # bf16 weights
        + (b1.size + b2.size + bh.size + std.size) * 4)
    cost = pl.CostEstimate(flops=int(flops), transcendentals=int(transcendentals),
                           bytes_accessed=bytes_accessed)

    kernel = functools.partial(actors_critic_kernel, action_dim=A)

    slab = pl.pallas_call(
        kernel,
        out_shape=jax.ShapeDtypeStruct((Bp, HEAD_N), jnp.float32),
        grid_spec=pltpu.PrefetchScalarGridSpec(
            num_scalar_prefetch=0,
            grid=grid,
            in_specs=[row_spec(S),
                      resident(w1), resident(b1),
                      resident(w2), resident(b2),
                      resident(wh), resident(bh),
                      resident(std),
                      row_spec(HEAD_N)],
            out_specs=row_spec(HEAD_N)),
        compiler_params=pltpu.CompilerParams(
            dimension_semantics=("parallel",)),
        cost_estimate=cost,
    )(obs_p, w1, b1, w2, b2, wh, bh, std, noise_p)

    parameter = slab[:B, A:2 * A]
    action = slab[:B, 2 * A].astype(jnp.int32)
    action_lp = slab[:B, 2 * A + 1]
    param_lp = slab[:B, 2 * A + 2]
    state_value = slab[:B, 2 * A + 3:2 * A + 4]
    return action, action_lp, parameter, param_lp, state_value


def init_linear(key, in_dim, out_dim):
    """Deterministic PyTorch-style nn.Linear init: U(-1/sqrt(in), 1/sqrt(in))."""
    kw, kb = jax.random.split(key)
    bound = 1.0 / jnp.sqrt(jnp.float32(in_dim))
    w = jax.random.uniform(kw, (in_dim, out_dim), jnp.float32, -bound, bound)
    b = jax.random.uniform(kb, (1, out_dim), jnp.float32, -bound, bound)
    return w, b


def reference_forward(obs, params, parameters_var, gumbel, eps):
    """Pure-JAX f32 reference of the PyTorch forward (same noise)."""
    (w1, b1, w2, b2, wa, ba, wp, bp, ws, bs) = params
    h1 = jax.nn.relu(obs @ w1 + b1)
    h2 = jax.nn.relu(h1 @ w2 + b2)
    sv = h2 @ ws + bs
    logp = jax.nn.log_softmax(h2 @ wa + ba, axis=-1)
    action = jnp.argmax(logp + gumbel, axis=-1)
    a_lp = jnp.take_along_axis(logp, action[:, None], axis=-1)[:, 0]
    mu = h2 @ wp + bp
    var = parameters_var.reshape(1, -1)
    sample = mu + jnp.sqrt(var) * eps
    A = mu.shape[-1]
    p_lp = -0.5 * (jnp.sum((sample - mu) ** 2 / var, axis=-1)
                   + A * jnp.log(2.0 * jnp.pi) + jnp.sum(jnp.log(var)))
    return action, a_lp, sample, p_lp, sv


if __name__ == "__main__":
    B, STATE_DIM, ACTION_DIM, UNITS = 8, 16, 4, 256

    root = jax.random.PRNGKey(0)
    keys = jax.random.split(root, 8)

    w1, b1 = init_linear(keys[0], STATE_DIM, UNITS)   # layer1
    w2, b2 = init_linear(keys[1], UNITS, UNITS)       # layer2
    wa, ba = init_linear(keys[2], UNITS, ACTION_DIM)  # action head
    wp, bp = init_linear(keys[3], UNITS, ACTION_DIM)  # param head
    ws, bs = init_linear(keys[4], UNITS, 1)           # state head
    params = (w1, b1, w2, b2, wa, ba, wp, bp, ws, bs)

    # parameter_std_init -> parameters_var = std * std (diagonal covariance)
    parameter_std = jnp.full((ACTION_DIM,), 0.5, jnp.float32)
    parameters_var = parameter_std * parameter_std

    obs = jax.random.normal(keys[5], (B, STATE_DIM), jnp.float32)

    # Sampling noise (deterministic): Gumbel for Categorical, Normal for MVN.
    u = jax.random.uniform(keys[6], (B, ACTION_DIM), jnp.float32,
                           minval=1e-6, maxval=1.0 - 1e-6)
    gumbel = -jnp.log(-jnp.log(u))
    eps = jax.random.normal(keys[7], (B, ACTION_DIM), jnp.float32)

    packed = pack_params(params, parameters_var)    # one-time packing (fused heads, bf16)
    outs = actors_critic_forward(obs, packed, gumbel, eps)
    outs = jax.block_until_ready(outs)
    action, action_lp, parameter, param_lp, state_value = outs

    assert action.shape == (B,) and action.dtype == jnp.int32
    assert action_lp.shape == (B,)
    assert parameter.shape == (B, ACTION_DIM)
    assert param_lp.shape == (B,)
    assert state_value.shape == (B, 1)

    # Sanity check vs pure-JAX f32 reference.
    # Loose tol: obs/w1/w2/head weights run in bf16 (f32 accumulation); bf16 can
    # also flip the sampled action near logit ties, so only its range is checked.
    r_action, r_alp, r_param, r_plp, r_sv = reference_forward(
        obs, params, parameters_var, gumbel, eps)
    assert bool(jnp.all((action >= 0) & (action < ACTION_DIM)))
    assert bool(jnp.all(jnp.isfinite(action_lp))) and bool(jnp.all(action_lp <= 0.0))
    assert bool(jnp.allclose(parameter, r_param, atol=5e-2, rtol=5e-2))
    assert bool(jnp.allclose(param_lp, r_plp, atol=5e-2, rtol=5e-2))
    assert bool(jnp.allclose(state_value, r_sv, atol=5e-2, rtol=5e-2))

    print("KERNEL_OK")
</pallas_src>

<mosaic_0001>
module attributes {stable_mosaic.version = 11 : i64} {
  func.func @actors_critic_kernel(%arg0: i32, %arg1: memref<16x16xbf16, #tpu.memory_space<vmem>>, %arg2: memref<16x256xbf16, #tpu.memory_space<vmem>>, %arg3: memref<1x256xf32, #tpu.memory_space<vmem>>, %arg4: memref<256x256xbf16, #tpu.memory_space<vmem>>, %arg5: memref<1x256xf32, #tpu.memory_space<vmem>>, %arg6: memref<256x128xbf16, #tpu.memory_space<vmem>>, %arg7: memref<1x128xf32, #tpu.memory_space<vmem>>, %arg8: memref<1x128xf32, #tpu.memory_space<vmem>>, %arg9: memref<16x128xf32, #tpu.memory_space<vmem>>, %arg10: memref<16x128xf32, #tpu.memory_space<vmem>>) attributes {dimension_semantics = [#tpu.dimension_semantics<parallel>], iteration_bounds = array<i64: 1>, scalar_prefetch = 0 : i64, scratch_operands = 0 : i64, tpu.core_type = #tpu.core_type<tc>, window_params = [{transform_indices = @transform_0, window_bounds = array<i64: 16, 16>}, {pipeline_mode = #tpu.pipeline_mode<synchronous>, transform_indices = @transform_1, window_bounds = array<i64: 16, 256>}, {pipeline_mode = #tpu.pipeline_mode<synchronous>, transform_indices = @transform_2, window_bounds = array<i64: 1, 256>}, {pipeline_mode = #tpu.pipeline_mode<synchronous>, transform_indices = @transform_3, window_bounds = array<i64: 256, 256>}, {pipeline_mode = #tpu.pipeline_mode<synchronous>, transform_indices = @transform_4, window_bounds = array<i64: 1, 256>}, {pipeline_mode = #tpu.pipeline_mode<synchronous>, transform_indices = @transform_5, window_bounds = array<i64: 256, 128>}, {pipeline_mode = #tpu.pipeline_mode<synchronous>, transform_indices = @transform_6, window_bounds = array<i64: 1, 128>}, {pipeline_mode = #tpu.pipeline_mode<synchronous>, transform_indices = @transform_7, window_bounds = array<i64: 1, 128>}, {transform_indices = @transform_8, window_bounds = array<i64: 16, 128>}, {transform_indices = @transform_9, window_bounds = array<i64: 16, 128>}]} {
    %c0 = arith.constant 0 : index
    %c0_0 = arith.constant 0 : index
    %0 = vector.load %arg1[%c0, %c0_0] : memref<16x16xbf16, #tpu.memory_space<vmem>>, vector<16x16xbf16>
    %c0_1 = arith.constant 0 : index
    %c0_2 = arith.constant 0 : index
    %1 = vector.load %arg2[%c0_1, %c0_2] : memref<16x256xbf16, #tpu.memory_space<vmem>>, vector<16x256xbf16>
    %cst = arith.constant dense<0.000000e+00> : vector<16x256xf32>
    %2 = tpu.matmul %0, %1, %cst {dimension_numbers = #tpu.dot_dimension_numbers<[1], [0], [0], [1], [0, 0, 1, 1], [], []>} : vector<16x16xbf16>, vector<16x256xbf16>, vector<16x256xf32> -> vector<16x256xf32>
    %c0_3 = arith.constant 0 : index
    %c0_4 = arith.constant 0 : index
    %3 = vector.load %arg3[%c0_3, %c0_4] : memref<1x256xf32, #tpu.memory_space<vmem>>, vector<1x256xf32>
    %4 = vector.broadcast %3 : vector<1x256xf32> to vector<16x256xf32>
    %5 = arith.addf %2, %4 : vector<16x256xf32>
    %cst_5 = arith.constant 0.000000e+00 : f32
    %6 = vector.broadcast %cst_5 : f32 to vector<16x256xf32>
    %7 = arith.maximumf %5, %6 : vector<16x256xf32>
    %8 = arith.truncf %7 : vector<16x256xf32> to vector<16x256xbf16>
    %c0_6 = arith.constant 0 : index
    %c0_7 = arith.constant 0 : index
    %9 = vector.load %arg4[%c0_6, %c0_7] : memref<256x256xbf16, #tpu.memory_space<vmem>>, vector<256x256xbf16>
    %cst_8 = arith.constant dense<0.000000e+00> : vector<16x256xf32>
    %10 = tpu.matmul %8, %9, %cst_8 {dimension_numbers = #tpu.dot_dimension_numbers<[1], [0], [0], [1], [0, 0, 1, 1], [], []>} : vector<16x256xbf16>, vector<256x256xbf16>, vector<16x256xf32> -> vector<16x256xf32>
    %c0_9 = arith.constant 0 : index
    %c0_10 = arith.constant 0 : index
    %11 = vector.load %arg5[%c0_9, %c0_10] : memref<1x256xf32, #tpu.memory_space<vmem>>, vector<1x256xf32>
    %12 = vector.broadcast %11 : vector<1x256xf32> to vector<16x256xf32>
    %13 = arith.addf %10, %12 : vector<16x256xf32>
    %cst_11 = arith.constant 0.000000e+00 : f32
    %14 = vector.broadcast %cst_11 : f32 to vector<16x256xf32>
    %15 = arith.maximumf %13, %14 : vector<16x256xf32>
    %16 = arith.truncf %15 : vector<16x256xf32> to vector<16x256xbf16>
    %c0_12 = arith.constant 0 : index
    %c0_13 = arith.constant 0 : index
    %17 = vector.load %arg6[%c0_12, %c0_13] : memref<256x128xbf16, #tpu.memory_space<vmem>>, vector<256x128xbf16>
    %cst_14 = arith.constant dense<0.000000e+00> : vector<16x128xf32>
    %18 = tpu.matmul %16, %17, %cst_14 {dimension_numbers = #tpu.dot_dimension_numbers<[1], [0], [0], [1], [0, 0, 1, 1], [], []>} : vector<16x256xbf16>, vector<256x128xbf16>, vector<16x128xf32> -> vector<16x128xf32>
    %c0_15 = arith.constant 0 : index
    %c0_16 = arith.constant 0 : index
    %19 = vector.load %arg7[%c0_15, %c0_16] : memref<1x128xf32, #tpu.memory_space<vmem>>, vector<1x128xf32>
    %20 = vector.broadcast %19 : vector<1x128xf32> to vector<16x128xf32>
    %21 = arith.addf %18, %20 : vector<16x128xf32>
    %c0_17 = arith.constant 0 : index
    %c0_18 = arith.constant 0 : index
    %22 = vector.load %arg9[%c0_17, %c0_18] : memref<16x128xf32, #tpu.memory_space<vmem>>, vector<16x128xf32>
    %23 = tpu.iota {dimensions = array<i32: 1>} : vector<16x128xi32>
    %c4_i32 = arith.constant 4 : i32
    %24 = vector.broadcast %c4_i32 : i32 to vector<16x128xi32>
    %25 = arith.cmpi slt, %23, %24 : vector<16x128xi32>
    %cst_19 = arith.constant -1.000000e+30 : f32
    %26 = vector.broadcast %cst_19 : f32 to vector<16x128xf32>
    %27 = arith.select %25, %21, %26 : vector<16x128xi1>, vector<16x128xf32>
    %cst_20 = arith.constant dense<0xFF800000> : vector<16xf32>
    %28 = vector.multi_reduction <maximumf>, %27, %cst_20 [1] : vector<16x128xf32> to vector<16xf32>
    %29 = vector.shape_cast %28 : vector<16xf32> to vector<16x1xf32>
    %30 = vector.broadcast %29 : vector<16x1xf32> to vector<16x128xf32>
    %31 = arith.subf %27, %30 : vector<16x128xf32>
    %32 = math.exp %31 : vector<16x128xf32>
    %cst_21 = arith.constant dense<0.000000e+00> : vector<16xf32>
    %33 = vector.multi_reduction <add>, %32, %cst_21 [1] : vector<16x128xf32> to vector<16xf32>
    %34 = vector.shape_cast %33 : vector<16xf32> to vector<16x1xf32>
    %35 = math.log %34 : vector<16x1xf32>
    %36 = vector.broadcast %35 : vector<16x1xf32> to vector<16x128xf32>
    %37 = arith.subf %31, %36 : vector<16x128xf32>
    %38 = arith.addf %37, %22 : vector<16x128xf32>
    %cst_22 = arith.constant dense<0xFF800000> : vector<16xf32>
    %39 = vector.multi_reduction <maximumf>, %38, %cst_22 [1] : vector<16x128xf32> to vector<16xf32>
    %40 = vector.shape_cast %39 : vector<16xf32> to vector<16x1xf32>
    %41 = vector.broadcast %40 : vector<16x1xf32> to vector<16x128xf32>
    %42 = arith.cmpf oge, %38, %41 : vector<16x128xf32>
    %c128_i32 = arith.constant 128 : i32
    %43 = vector.broadcast %c128_i32 : i32 to vector<16x128xi32>
    %44 = arith.select %42, %23, %43 : vector<16x128xi1>, vector<16x128xi32>
    %cst_23 = arith.constant dense<2147483647> : vector<16xi32>
    %45 = vector.multi_reduction <minsi>, %44, %cst_23 [1] : vector<16x128xi32> to vector<16xi32>
    %46 = vector.shape_cast %45 : vector<16xi32> to vector<16x1xi32>
    %47 = vector.broadcast %46 : vector<16x1xi32> to vector<16x128xi32>
    %48 = arith.cmpi eq, %23, %47 : vector<16x128xi32>
    %cst_24 = arith.constant 0.000000e+00 : f32
    %49 = vector.broadcast %cst_24 : f32 to vector<16x128xf32>
    %50 = arith.select %48, %37, %49 : vector<16x128xi1>, vector<16x128xf32>
    %cst_25 = arith.constant dense<0.000000e+00> : vector<16xf32>
    %51 = vector.multi_reduction <add>, %50, %cst_25 [1] : vector<16x128xf32> to vector<16xf32>
    %52 = vector.shape_cast %51 : vector<16xf32> to vector<16x1xf32>
    %c4_i32_26 = arith.constant 4 : i32
    %53 = vector.broadcast %c4_i32_26 : i32 to vector<16x128xi32>
    %54 = arith.cmpi sge, %23, %53 : vector<16x128xi32>
    %c8_i32 = arith.constant 8 : i32
    %55 = vector.broadcast %c8_i32 : i32 to vector<16x128xi32>
    %56 = arith.cmpi slt, %23, %55 : vector<16x128xi32>
    %57 = arith.andi %54, %56 : vector<16x128xi1>
    %c0_27 = arith.constant 0 : index
    %c0_28 = arith.constant 0 : index
    %58 = vector.load %arg8[%c0_27, %c0_28] : memref<1x128xf32, #tpu.memory_space<vmem>>, vector<1x128xf32>
    %59 = vector.broadcast %58 : vector<1x128xf32> to vector<16x128xf32>
    %60 = arith.mulf %59, %22 : vector<16x128xf32>
    %61 = arith.addf %21, %60 : vector<16x128xf32>
    %cst_29 = arith.constant 0.000000e+00 : f32
    %62 = vector.broadcast %cst_29 : f32 to vector<16x128xf32>
    %63 = arith.select %57, %61, %62 : vector<16x128xi1>, vector<16x128xf32>
    %64 = arith.mulf %22, %22 : vector<16x128xf32>
    %cst_30 = arith.constant 0.000000e+00 : f32
    %65 = vector.broadcast %cst_30 : f32 to vector<16x128xf32>
    %66 = arith.select %57, %64, %65 : vector<16x128xi1>, vector<16x128xf32>
    %c10_i32 = arith.constant 10 : i32
    %67 = vector.broadcast %c10_i32 : i32 to vector<16x128xi32>
    %68 = arith.cmpi eq, %23, %67 : vector<16x128xi32>
    %cst_31 = arith.constant 0.000000e+00 : f32
    %69 = vector.broadcast %cst_31 : f32 to vector<16x128xf32>
    %70 = arith.select %68, %21, %69 : vector<16x128xi1>, vector<16x128xf32>
    %cst_32 = arith.constant dense<0.000000e+00> : vector<16xf32>
    %71 = vector.multi_reduction <add>, %70, %cst_32 [1] : vector<16x128xf32> to vector<16xf32>
    %72 = vector.shape_cast %71 : vector<16xf32> to vector<16x1xf32>
    %cst_33 = arith.constant dense<0.000000e+00> : vector<16xf32>
    %73 = vector.multi_reduction <add>, %66, %cst_33 [1] : vector<16x128xf32> to vector<16xf32>
    %74 = vector.shape_cast %73 : vector<16xf32> to vector<16x1xf32>
    %cst_34 = arith.constant 5.000000e-01 : f32
    %75 = vector.broadcast %cst_34 : f32 to vector<16x1xf32>
    %76 = arith.mulf %75, %74 : vector<16x1xf32>
    %77 = arith.subf %72, %76 : vector<16x1xf32>
    %c8_i32_35 = arith.constant 8 : i32
    %78 = vector.broadcast %c8_i32_35 : i32 to vector<16x128xi32>
    %79 = arith.cmpi eq, %23, %78 : vector<16x128xi32>
    %cst_36 = arith.constant 0.000000e+00 : f32
    %80 = vector.broadcast %cst_36 : f32 to vector<16x128xf32>
    %81 = arith.select %79, %21, %80 : vector<16x128xi1>, vector<16x128xf32>
    %cst_37 = arith.constant dense<0.000000e+00> : vector<16xf32>
    %82 = vector.multi_reduction <add>, %81, %cst_37 [1] : vector<16x128xf32> to vector<16xf32>
    %83 = vector.shape_cast %82 : vector<16xf32> to vector<16x1xf32>
    %c8_i32_38 = arith.constant 8 : i32
    %84 = vector.broadcast %c8_i32_38 : i32 to vector<16x128xi32>
    %85 = arith.cmpi eq, %23, %84 : vector<16x128xi32>
    %86 = arith.sitofp %46 : vector<16x1xi32> to vector<16x1xf32>
    %87 = vector.shape_cast %86 : vector<16x1xf32> to vector<16x1xf32>
    %88 = vector.broadcast %87 : vector<16x1xf32> to vector<16x128xf32>
    %89 = arith.select %85, %88, %63 : vector<16x128xi1>, vector<16x128xf32>
    %c9_i32 = arith.constant 9 : i32
    %90 = vector.broadcast %c9_i32 : i32 to vector<16x128xi32>
    %91 = arith.cmpi eq, %23, %90 : vector<16x128xi32>
    %92 = vector.shape_cast %52 : vector<16x1xf32> to vector<16x1xf32>
    %93 = vector.broadcast %92 : vector<16x1xf32> to vector<16x128xf32>
    %94 = arith.select %91, %93, %89 : vector<16x128xi1>, vector<16x128xf32>
    %c10_i32_39 = arith.constant 10 : i32
    %95 = vector.broadcast %c10_i32_39 : i32 to vector<16x128xi32>
    %96 = arith.cmpi eq, %23, %95 : vector<16x128xi32>
    %97 = vector.shape_cast %77 : vector<16x1xf32> to vector<16x1xf32>
    %98 = vector.broadcast %97 : vector<16x1xf32> to vector<16x128xf32>
    %99 = arith.select %96, %98, %94 : vector<16x128xi1>, vector<16x128xf32>
    %c11_i32 = arith.constant 11 : i32
    %100 = vector.broadcast %c11_i32 : i32 to vector<16x128xi32>
    %101 = arith.cmpi eq, %23, %100 : vector<16x128xi32>
    %102 = vector.shape_cast %83 : vector<16x1xf32> to vector<16x1xf32>
    %103 = vector.broadcast %102 : vector<16x1xf32> to vector<16x128xf32>
    %104 = arith.select %101, %103, %99 : vector<16x128xi1>, vector<16x128xf32>
    %c0_40 = arith.constant 0 : index
    %c0_41 = arith.constant 0 : index
    %105 = vector.load %arg10[%c0_40, %c0_41] : memref<16x128xf32, #tpu.memory_space<vmem>>, vector<16x128xf32>
    tpu.vector_store %arg10[%c0_40, %c0_41], %104 {strides = array<i32>} : memref<16x128xf32, #tpu.memory_space<vmem>>, vector<16x128xf32>,
    return
  }
  func.func @transform_0(%arg0: i32) -> (i32, i32) {
    %c0_i32 = arith.constant 0 : i32
    %c0_i32_0 = arith.constant 0 : i32
    return %arg0, %c0_i32 : i32, i32
  }
  func.func @transform_1(%arg0: i32) -> (i32, i32) {
    %c0_i32 = arith.constant 0 : i32
    %c0_i32_0 = arith.constant 0 : i32
    %c0_i32_1 = arith.constant 0 : i32
    return %c0_i32, %c0_i32_0 : i32, i32
  }
  func.func @transform_2(%arg0: i32) -> (i32, i32) {
    %c0_i32 = arith.constant 0 : i32
    %c0_i32_0 = arith.constant 0 : i32
    %c0_i32_1 = arith.constant 0 : i32
    return %c0_i32, %c0_i32_0 : i32, i32
  }
  func.func @transform_3(%arg0: i32) -> (i32, i32) {
    %c0_i32 = arith.constant 0 : i32
    %c0_i32_0 = arith.constant 0 : i32
    %c0_i32_1 = arith.constant 0 : i32
    return %c0_i32, %c0_i32_0 : i32, i32
  }
  func.func @transform_4(%arg0: i32) -> (i32, i32) {
    %c0_i32 = arith.constant 0 : i32
    %c0_i32_0 = arith.constant 0 : i32
    %c0_i32_1 = arith.constant 0 : i32
    return %c0_i32, %c0_i32_0 : i32, i32
  }
  func.func @transform_5(%arg0: i32) -> (i32, i32) {
    %c0_i32 = arith.constant 0 : i32
    %c0_i32_0 = arith.constant 0 : i32
    %c0_i32_1 = arith.constant 0 : i32
    return %c0_i32, %c0_i32_0 : i32, i32
  }
  func.func @transform_6(%arg0: i32) -> (i32, i32) {
    %c0_i32 = arith.constant 0 : i32
    %c0_i32_0 = arith.constant 0 : i32
    %c0_i32_1 = arith.constant 0 : i32
    return %c0_i32, %c0_i32_0 : i32, i32
  }
  func.func @transform_7(%arg0: i32) -> (i32, i32) {
    %c0_i32 = arith.constant 0 : i32
    %c0_i32_0 = arith.constant 0 : i32
    %c0_i32_1 = arith.constant 0 : i32
    return %c0_i32, %c0_i32_0 : i32, i32
  }
  func.func @transform_8(%arg0: i32) -> (i32, i32) {
    %c0_i32 = arith.constant 0 : i32
    %c0_i32_0 = arith.constant 0 : i32
    return %arg0, %c0_i32 : i32, i32
  }
  func.func @transform_9(%arg0: i32) -> (i32, i32) {
    %c0_i32 = arith.constant 0 : i32
    %c0_i32_0 = arith.constant 0 : i32
    return %arg0, %c0_i32 : i32, i32
  }
}

</mosaic_0001>

<llo_original>
// kernel: tpu_custom_call.1
$region0: #{tpu_custom_call.1}
  #allocation0 [shape = 'u32[]', space=smem, size = 0x4, offset = 0x4, fixed_abs, tag = 'smem constant byte address 0x4 - core index']
  #allocation1 [shape = 'u32[144,128]{1,0:T(1,128)}', space=vmem, size = 0x12000, scoped, tag = 'internal scratch']
  %s0 = inlined_call_operand.hbm [shape: bf16[16,16], index: 0, kind: input, shape index: {}]
  %s1 = inlined_call_operand.hbm [shape: bf16[16,256], index: 1, kind: input, shape index: {}]
  %s2 = inlined_call_operand.vmem [shape: f32[1,256], index: 2, kind: input, shape index: {}]
  %s3 = inlined_call_operand.hbm [shape: bf16[256,256], index: 3, kind: input, shape index: {}]
  %s4 = inlined_call_operand.vmem [shape: f32[1,256], index: 4, kind: input, shape index: {}]
  %s5 = inlined_call_operand.hbm [shape: bf16[256,128], index: 5, kind: input, shape index: {}]
  %s6 = inlined_call_operand.vmem [shape: f32[1,128], index: 6, kind: input, shape index: {}]
  %s7 = inlined_call_operand.vmem [shape: f32[1,128], index: 7, kind: input, shape index: {}]
  %s8 = inlined_call_operand.vmem [shape: f32[16,128], index: 8, kind: input, shape index: {}]
  %s9 = inlined_call_operand.hbm [shape: f32[16,128], index: 9, kind: output, shape index: {}]
  %s10 = sld [smem:[#allocation0]]
  $region62: #{tpu_custom_call.1} parent=0
    _
  %s12 = ssub.s32 1, %s10
  %s13 = scalar_select 0, %s12, %s10
  $region1: #{tpu_custom_call.1} parent=0
    #allocation2 [shape = 'u8[4096]{0}', space=vmem, size = 0x1000, scoped, tag = 'input window, operand 0, single buffered']
    #allocation3 [shape = 's32[1]{0}', space=sflag, size = 0x4, scoped, tag = 'scoped memory for tpu_custom_call.1']
    #allocation4 [shape = 's32[1]{0}', space=sflag, size = 0x4, scoped, tag = 'scoped memory for tpu_custom_call.1']
    #allocation5 [shape = 'u8[8192]{0}', space=vmem, size = 0x2000, scoped, tag = 'input window, operand 1, single buffered']
    #allocation6 [shape = 's32[1]{0}', space=sflag, size = 0x4, scoped, tag = 'scoped memory for tpu_custom_call.1']
    #allocation7 [shape = 'u8[131072]{0}', space=vmem, size = 0x20000, scoped, tag = 'input window, operand 3, single buffered']
    #allocation8 [shape = 'u8[65536]{0}', space=vmem, size = 0x10000, scoped, tag = 'input window, operand 5, single buffered']
    #allocation9 [shape = 's32[1]{0}', space=sflag, size = 0x4, scoped, tag = 'scoped memory for tpu_custom_call.1']
    #allocation10 [shape = 'u8[8192]{0}', space=vmem, size = 0x2000, scoped, tag = 'output window, operand 0, single buffered']
    %14 = vsyncpa [#allocation3], 0
    %15 = vsyncpa [#allocation6], 0
    %16 = vsyncpa [#allocation9], 0
    %17 = vsyncpa [#allocation4], 0
    // Predicated region
    $region2: #{tpu_custom_call.1} parent=1 // pred_check
      _
    $region3: #{tpu_custom_call.1} parent=1 // pred_check_branch
      %19 = sbr.rel (0) target = $region5
    $region4: #{tpu_custom_call.1} parent=1 // pred_region
      %s21 = ssub.s32 128, 128
      %22 = vsyncadd [#allocation3], %s21
      %s23 = sshll.u32 [#allocation2], 4
      %s24 = int_to_ptr.vmem [resolvable:$true] %s23
      %29 = dma.hbm_to_vmem [thread:$0]  %s0, 128, %s24, [#allocation3], 64, 64, 4
    $region5: #{tpu_custom_call.1} parent=1 // pred_fallthru
      _
    // Predicated region
    $region6: #{tpu_custom_call.1} parent=1 // pred_check
      _
    $region7: #{tpu_custom_call.1} parent=1 // pred_check_branch
      %31 = sbr.rel (0) target = $region9
    $region8: #{tpu_custom_call.1} parent=1 // pred_region
      %s33 = ssub.s32 256, 256
      %34 = vsyncadd [#allocation6], %s33
      %s35 = sshll.u32 [#allocation5], 4
      %s36 = int_to_ptr.vmem [resolvable:$true] %s35
      %41 = dma.hbm_to_vmem [thread:$0]  %s1, 256, %s36, [#allocation6], 128, 128, 8
    $region9: #{tpu_custom_call.1} parent=1 // pred_fallthru
      _
    // Predicated region
    $region10: #{tpu_custom_call.1} parent=1 // pred_check
      _
    $region11: #{tpu_custom_call.1} parent=1 // pred_check_branch
      %43 = sbr.rel (0) target = $region13
    $region12: #{tpu_custom_call.1} parent=1 // pred_region
      _
    $region13: #{tpu_custom_call.1} parent=1 // pred_fallthru
      _
    // Predicated region
    $region14: #{tpu_custom_call.1} parent=1 // pred_check
      _
    $region15: #{tpu_custom_call.1} parent=1 // pred_check_branch
      %45 = sbr.rel (0) target = $region17
    $region16: #{tpu_custom_call.1} parent=1 // pred_region
      %s47 = ssub.s32 4096, 4096
      %48 = vsyncadd [#allocation6], %s47
      %s49 = sshll.u32 [#allocation7], 4
      %s50 = int_to_ptr.vmem [resolvable:$true] %s49
      %55 = dma.hbm_to_vmem [thread:$0]  %s3, 4096, %s50, [#allocation6], 128, 128, 8
    $region17: #{tpu_custom_call.1} parent=1 // pred_fallthru
      _
    // Predicated region
    $region18: #{tpu_custom_call.1} parent=1 // pred_check
      _
    $region19: #{tpu_custom_call.1} parent=1 // pred_check_branch
      %57 = sbr.rel (0) target = $region21
    $region20: #{tpu_custom_call.1} parent=1 // pred_region
      _
    $region21: #{tpu_custom_call.1} parent=1 // pred_fallthru
      _
    // Predicated region
    $region22: #{tpu_custom_call.1} parent=1 // pred_check
      _
    $region23: #{tpu_custom_call.1} parent=1 // pred_check_branch
      %59 = sbr.rel (0) target = $region25
    $region24: #{tpu_custom_call.1} parent=1 // pred_region
      %s61 = ssub.s32 2048, 2048
      %62 = vsyncadd [#allocation9], %s61
      %s63 = sshll.u32 [#allocation8], 4
      %s64 = int_to_ptr.vmem [resolvable:$true] %s63
      %69 = dma.hbm_to_vmem [thread:$0]  %s5, 2048, %s64, [#allocation9], 64, 64, 4
    $region25: #{tpu_custom_call.1} parent=1 // pred_fallthru
      _
    // Predicated region
    $region26: #{tpu_custom_call.1} parent=1 // pred_check
      _
    $region27: #{tpu_custom_call.1} parent=1 // pred_check_branch
      %71 = sbr.rel (0) target = $region29
    $region28: #{tpu_custom_call.1} parent=1 // pred_region
      _
    $region29: #{tpu_custom_call.1} parent=1 // pred_fallthru
      _
    // Predicated region
    $region30: #{tpu_custom_call.1} parent=1 // pred_check
      _
    $region31: #{tpu_custom_call.1} parent=1 // pred_check_branch
      %73 = sbr.rel (0) target = $region33
    $region32: #{tpu_custom_call.1} parent=1 // pred_region
      _
    $region33: #{tpu_custom_call.1} parent=1 // pred_fallthru
      _
    // Predicated region
    $region34: #{tpu_custom_call.1} parent=1 // pred_check
      _
    $region35: #{tpu_custom_call.1} parent=1 // pred_check_branch
      %75 = sbr.rel (0) target = $region37
    $region36: #{tpu_custom_call.1} parent=1 // pred_region
      _
    $region37: #{tpu_custom_call.1} parent=1 // pred_fallthru
      _
    // Predicated region
    $region38: #{tpu_custom_call.1} parent=1 // pred_check
      _
    $region39: #{tpu_custom_call.1} parent=1 // pred_check_branch
      %77 = sbr.rel (0) target = $region41
    $region40: #{tpu_custom_call.1} parent=1 // pred_region
      %78 = dma.done [#allocation3], 128
    $region41: #{tpu_custom_call.1} parent=1 // pred_fallthru
      _
    // Predicated region
    $region42: #{tpu_custom_call.1} parent=1 // pred_check
      _
    $region43: #{tpu_custom_call.1} parent=1 // pred_check_branch
      %80 = sbr.rel (0) target = $region45
    $region44: #{tpu_custom_call.1} parent=1 // pred_region
      %81 = dma.done [#allocation6], 256
    $region45: #{tpu_custom_call.1} parent=1 // pred_fallthru
      _
    // Predicated region
    $region46: #{tpu_custom_call.1} parent=1 // pred_check
      _
    $region47: #{tpu_custom_call.1} parent=1 // pred_check_branch
      %83 = sbr.rel (0) target = $region49
    $region48: #{tpu_custom_call.1} parent=1 // pred_region
      %84 = dma.done [#allocation6], 4096
    $region49: #{tpu_custom_call.1} parent=1 // pred_fallthru
      _
    // Predicated region
    $region50: #{tpu_custom_call.1} parent=1 // pred_check
      _
    $region51: #{tpu_custom_call.1} parent=1 // pred_check_branch
      %86 = sbr.rel (0) target = $region53
    $region52: #{tpu_custom_call.1} parent=1 // pred_region
      %87 = dma.done [#allocation9], 2048
    $region53: #{tpu_custom_call.1} parent=1 // pred_fallthru
      _
    %v89 = vld [vmem:[#allocation2] sm:$0xf]
    %v90 = vld [vmem:[#allocation2 + $0x4] sm:$0xf]
    %v91 = vld [vmem:[#allocation5] sm:$0xff]
    %v92 = vld [vmem:[#allocation5 + $0x8] sm:$0xff]
    %v93 = vld [vmem:[%s2] sm:$0x3]
    %v95 = vlaneseq
    %v96 = vshrl.u32 %v95, 7
    %v97 = vsub.s32 0, %v96
    %v98 = vrot.slane %v93, %v97
    %v99 = vlaneseq
    %v100 = vshrl.u32 %v99, 7
    %v101 = vsub.s32 1, %v100
    %v102 = vrot.slane %v93, %v101
    %v107 = vunpack.c.l.b16 %v89
    %v108 = vunpack.c.l.b16 %v90
    %v109 = vpack.c.b16 %v108, %v107
    %v112 = vunpack.c.l.b16 %v91
    %v113 = vunpack.c.h.b16 %v91
    %v114 = vunpack.c.l.b16 %v92
    %v115 = vunpack.c.h.b16 %v92
    %v116 = vpack.c.b16 %v114, %v112
    %v117 = vpack.c.b16 %v115, %v113
    %vm120 = vcmask 130048
    %v122 = vsel %vm120, %v109, 0
    %124 = vmatprep.subr.bf16.mxu0 %v117
    %125 = vmatpush1.bf16.msra.mxu0 %v116
    %126 = vmatprep.subr.bf16.mxu0 0
    %127 = vmatpush1.bf16.msra.mxu0 0
    %128 = vmatprep.subr.bf16.mxu0 0
    %129 = vmatpush1.bf16.msra.mxu0 0
    %130 = vmatprep.subr.bf16.mxu0 0
    %131 = vmatpush1.bf16.msra.mxu0 0
    %132 = vmatprep.subr.bf16.mxu0 0
    %133 = vmatpush1.bf16.msra.mxu0 0
    %134 = vmatprep.subr.bf16.mxu0 0
    %135 = vmatpush1.bf16.msra.mxu0 0
    %136 = vmatprep.subr.bf16.mxu0 0
    %137 = vmatpush1.bf16.msra.mxu0 0
    %138 = vmatprep.subr.bf16.mxu0 0
    %139 = vmatpush1.bf16.msra.mxu0 0
    %140 = vmatprep.subr.bf16.mxu0 0
    %141 = vmatpush1.bf16.msra.mxu0 0
    %142 = vmatprep.subr.bf16.mxu0 0
    %143 = vmatpush1.bf16.msra.mxu0 0
    %144 = vmatprep.subr.bf16.mxu0 0
    %145 = vmatpush1.bf16.msra.mxu0 0
    %146 = vmatprep.subr.bf16.mxu0 0
    %147 = vmatpush1.bf16.msra.mxu0 0
    %148 = vmatprep.subr.bf16.mxu0 0
    %149 = vmatpush1.bf16.msra.mxu0 0
    %150 = vmatprep.subr.bf16.mxu0 0
    %151 = vmatpush1.bf16.msra.mxu0 0
    %152 = vmatprep.subr.bf16.mxu0 0
    %153 = vmatpush1.bf16.msra.mxu0 0
    %154 = vmatprep.subr.bf16.mxu0 0
    %155 = vmatpush1.bf16.msra.mxu0 0
    %156 = vmatprep.mubr.bf16.mxu0 0
    %157 = vmatmul.mubr.bf16.gmra.mrb[0].mxu0 %v122
    %v158 = vpop.f32.mrb[0].mxu0
    %v159 = vadd.f32 %v98, %v158
    %v160 = vpop.f32.mrb[0].mxu0
    %v161 = vadd.f32 %v102, %v160
    %v162 = vpop.f32.mrb[0].mxu0
    %v163 = vadd.f32 %v98, %v162
    %v164 = vpop.f32.mrb[0].mxu0
    %v165 = vadd.f32 %v102, %v164
    %166 = vdwg.mxu0
    %v167 = vmax.f32 %v159, 0.0
    %v168 = vmax.f32 %v161, 0.0
    %v169 = vmax.f32 %v163, 0.0
    %v170 = vmax.f32 %v165, 0.0
    %v171 = vpack.c.bf16 %v169, %v167
    %v172 = vpack.c.bf16 %v170, %v168
    %v173 = vld [vmem:[#allocation7] sm:$0xff]
    %v174 = vld [vmem:[#allocation7 + $0x8] sm:$0xff]
    %v175 = vld [vmem:[#allocation7 + $0x10] sm:$0xff]
    %v176 = vld [vmem:[#allocation7 + $0x18] sm:$0xff]
    %v177 = vld [vmem:[#allocation7 + $0x20] sm:$0xff]
    %v178 = vld [vmem:[#allocation7 + $0x28] sm:$0xff]
    %v179 = vld [vmem:[#allocation7 + $0x30] sm:$0xff]
    %v180 = vld [vmem:[#allocation7 + $0x38] sm:$0xff]
    %v181 = vld [vmem:[#allocation7 + $0x40] sm:$0xff]
    %v182 = vld [vmem:[#allocation7 + $0x48] sm:$0xff]
    %v183 = vld [vmem:[#allocation7 + $0x50] sm:$0xff]
    %v184 = vld [vmem:[#allocation7 + $0x58] sm:$0xff]
    %v185 = vld [vmem:[#allocation7 + $0x60] sm:$0xff]
    %v186 = vld [vmem:[#allocation7 + $0x68] sm:$0xff]
    %v187 = vld [vmem:[#allocation7 + $0x70] sm:$0xff]
    %v188 = vld [vmem:[#allocation7 + $0x78] sm:$0xff]
    %v189 = vld [vmem:[#allocation7 + $0x80] sm:$0xff]
    %v190 = vld [vmem:[#allocation7 + $0x88] sm:$0xff]
    %v191 = vld [vmem:[#allocation7 + $0x90] sm:$0xff]
    %v192 = vld [vmem:[#allocation7 + $0x98] sm:$0xff]
    %v193 = vld [vmem:[#allocation7 + $0xa0] sm:$0xff]
    %v194 = vld [vmem:[#allocation7 + $0xa8] sm:$0xff]
    %v195 = vld [vmem:[#allocation7 + $0xb0] sm:$0xff]
    %v196 = vld [vmem:[#allocation7 + $0xb8] sm:$0xff]
    %v197 = vld [vmem:[#allocation7 + $0xc0] sm:$0xff]
    %v198 = vld [vmem:[#allocation7 + $0xc8] sm:$0xff]
    %v199 = vld [vmem:[#allocation7 + $0xd0] sm:$0xff]
    %v200 = vld [vmem:[#allocation7 + $0xd8] sm:$0xff]
    %v201 = vld [vmem:[#allocation7 + $0xe0] sm:$0xff]
    %v202 = vld [vmem:[#allocation7 + $0xe8] sm:$0xff]
    %v203 = vld [vmem:[#allocation7 + $0xf0] sm:$0xff]
    %v204 = vld [vmem:[#allocation7 + $0xf8] sm:$0xff]
    %v205 = vld [vmem:[%s4] sm:$0x3]
    %v207 = vlaneseq
    %v208 = vshrl.u32 %v207, 7
    %v209 = vsub.s32 0, %v208
    %v210 = vrot.slane %v205, %v209
    %v211 = vlaneseq
    %v212 = vshrl.u32 %v211, 7
    %v213 = vsub.s32 1, %v212
    %v214 = vrot.slane %v205, %v213
    %v249 = vunpack.c.l.b16 %v173
    %v250 = vunpack.c.h.b16 %v173
    %v251 = vunpack.c.l.b16 %v174
    %v252 = vunpack.c.h.b16 %v174
    %v253 = vunpack.c.l.b16 %v175
    %v254 = vunpack.c.h.b16 %v175
    %v255 = vunpack.c.l.b16 %v176
    %v256 = vunpack.c.h.b16 %v176
    %v257 = vunpack.c.l.b16 %v177
    %v258 = vunpack.c.h.b16 %v177
    %v259 = vunpack.c.l.b16 %v178
    %v260 = vunpack.c.h.b16 %v178
    %v261 = vunpack.c.l.b16 %v179
    %v262 = vunpack.c.h.b16 %v179
    %v263 = vunpack.c.l.b16 %v180
    %v264 = vunpack.c.h.b16 %v180
    %v265 = vunpack.c.l.b16 %v181
    %v266 = vunpack.c.h.b16 %v181
    %v267 = vunpack.c.l.b16 %v182
    %v268 = vunpack.c.h.b16 %v182
    %v269 = vunpack.c.l.b16 %v183
    %v270 = vunpack.c.h.b16 %v183
    %v271 = vunpack.c.l.b16 %v184
    %v272 = vunpack.c.h.b16 %v184
    %v273 = vunpack.c.l.b16 %v185
    %v274 = vunpack.c.h.b16 %v185
    %v275 = vunpack.c.l.b16 %v186
    %v276 = vunpack.c.h.b16 %v186
    %v277 = vunpack.c.l.b16 %v187
    %v278 = vunpack.c.h.b16 %v187
    %v279 = vunpack.c.l.b16 %v188
    %v280 = vunpack.c.h.b16 %v188
    %v281 = vunpack.c.l.b16 %v189
    %v282 = vunpack.c.h.b16 %v189
    %v283 = vunpack.c.l.b16 %v190
    %v284 = vunpack.c.h.b16 %v190
    %v285 = vunpack.c.l.b16 %v191
    %v286 = vunpack.c.h.b16 %v191
    %v287 = vunpack.c.l.b16 %v192
    %v288 = vunpack.c.h.b16 %v192
    %v289 = vunpack.c.l.b16 %v193
    %v290 = vunpack.c.h.b16 %v193
    %v291 = vunpack.c.l.b16 %v194
    %v292 = vunpack.c.h.b16 %v194
    %v293 = vunpack.c.l.b16 %v195
    %v294 = vunpack.c.h.b16 %v195
    %v295 = vunpack.c.l.b16 %v196
    %v296 = vunpack.c.h.b16 %v196
    %v297 = vunpack.c.l.b16 %v197
    %v298 = vunpack.c.h.b16 %v197
    %v299 = vunpack.c.l.b16 %v198
    %v300 = vunpack.c.h.b16 %v198
    %v301 = vunpack.c.l.b16 %v199
    %v302 = vunpack.c.h.b16 %v199
    %v303 = vunpack.c.l.b16 %v200
    %v304 = vunpack.c.h.b16 %v200
    %v305 = vunpack.c.l.b16 %v201
    %v306 = vunpack.c.h.b16 %v201
    %v307 = vunpack.c.l.b16 %v202
    %v308 = vunpack.c.h.b16 %v202
    %v309 = vunpack.c.l.b16 %v203
    %v310 = vunpack.c.h.b16 %v203
    %v311 = vunpack.c.l.b16 %v204
    %v312 = vunpack.c.h.b16 %v204
    %v313 = vpack.c.b16 %v251, %v249
    %v314 = vpack.c.b16 %v252, %v250
    %v315 = vpack.c.b16 %v255, %v253
    %v316 = vpack.c.b16 %v256, %v254
    %v317 = vpack.c.b16 %v259, %v257
    %v318 = vpack.c.b16 %v260, %v258
    %v319 = vpack.c.b16 %v263, %v261
    %v320 = vpack.c.b16 %v264, %v262
    %v321 = vpack.c.b16 %v267, %v265
    %v322 = vpack.c.b16 %v268, %v266
    %v323 = vpack.c.b16 %v271, %v269
    %v324 = vpack.c.b16 %v272, %v270
    %v325 = vpack.c.b16 %v275, %v273
    %v326 = vpack.c.b16 %v276, %v274
    %v327 = vpack.c.b16 %v279, %v277
    %v328 = vpack.c.b16 %v280, %v278
    %v329 = vpack.c.b16 %v283, %v281
    %v330 = vpack.c.b16 %v284, %v282
    %v331 = vpack.c.b16 %v287, %v285
    %v332 = vpack.c.b16 %v288, %v286
    %v333 = vpack.c.b16 %v291, %v289
    %v334 = vpack.c.b16 %v292, %v290
    %v335 = vpack.c.b16 %v295, %v293
    %v336 = vpack.c.b16 %v296, %v294
    %v337 = vpack.c.b16 %v299, %v297
    %v338 = vpack.c.b16 %v300, %v298
    %v339 = vpack.c.b16 %v303, %v301
    %v340 = vpack.c.b16 %v304, %v302
    %v341 = vpack.c.b16 %v307, %v305
    %v342 = vpack.c.b16 %v308, %v306
    %v343 = vpack.c.b16 %v311, %v309
    %v344 = vpack.c.b16 %v312, %v310
    %377 = vmatprep.subr.bf16.mxu0 %v314
    %378 = vmatpush1.bf16.msra.mxu0 %v313
    %379 = vmatprep.subr.bf16.mxu0 %v316
    %380 = vmatpush1.bf16.msra.mxu0 %v315
    %381 = vmatprep.subr.bf16.mxu0 %v318
    %382 = vmatpush1.bf16.msra.mxu0 %v317
    %383 = vmatprep.subr.bf16.mxu0 %v320
    %384 = vmatpush1.bf16.msra.mxu0 %v319
    %385 = vmatprep.subr.bf16.mxu0 %v322
    %386 = vmatpush1.bf16.msra.mxu0 %v321
    %387 = vmatprep.subr.bf16.mxu0 %v324
    %388 = vmatpush1.bf16.msra.mxu0 %v323
    %389 = vmatprep.subr.bf16.mxu0 %v326
    %390 = vmatpush1.bf16.msra.mxu0 %v325
    %391 = vmatprep.subr.bf16.mxu0 %v328
    %392 = vmatpush1.bf16.msra.mxu0 %v327
    %393 = vmatprep.subr.bf16.mxu0 %v330
    %394 = vmatpush1.bf16.msra.mxu0 %v329
    %395 = vmatprep.subr.bf16.mxu0 %v332
    %396 = vmatpush1.bf16.msra.mxu0 %v331
    %397 = vmatprep.subr.bf16.mxu0 %v334
    %398 = vmatpush1.bf16.msra.mxu0 %v333
    %399 = vmatprep.subr.bf16.mxu0 %v336
    %400 = vmatpush1.bf16.msra.mxu0 %v335
    %401 = vmatprep.subr.bf16.mxu0 %v338
    %402 = vmatpush1.bf16.msra.mxu0 %v337
    %403 = vmatprep.subr.bf16.mxu0 %v340
    %404 = vmatpush1.bf16.msra.mxu0 %v339
    %405 = vmatprep.subr.bf16.mxu0 %v342
    %406 = vmatpush1.bf16.msra.mxu0 %v341
    %407 = vmatprep.subr.bf16.mxu0 %v344
    %408 = vmatpush1.bf16.msra.mxu0 %v343
    %409 = vmatprep.mubr.bf16.mxu0 %v172
    %410 = vmatmul.mubr.bf16.gmra.mrb[0].mxu0 %v171
    %v411 = vpop.f32.mrb[0].mxu0
    %v412 = vadd.f32 %v210, %v411
    %v413 = vpop.f32.mrb[0].mxu0
    %v414 = vadd.f32 %v214, %v413
    %v415 = vpop.f32.mrb[0].mxu0
    %v416 = vadd.f32 %v210, %v415
    %v417 = vpop.f32.mrb[0].mxu0
    %v418 = vadd.f32 %v214, %v417
    %419 = vdwg.mxu0
    %v420 = vmax.f32 %v412, 0.0
    %v421 = vmax.f32 %v414, 0.0
    %v422 = vmax.f32 %v416, 0.0
    %v423 = vmax.f32 %v418, 0.0
    %v424 = vpack.c.bf16 %v422, %v420
    %v425 = vpack.c.bf16 %v423, %v421
    %v426 = vld [vmem:[#allocation8] sm:$0xf]
    %v427 = vld [vmem:[#allocation8 + $0x4] sm:$0xf]
    %v428 = vld [vmem:[#allocation8 + $0x8] sm:$0xf]
    %v429 = vld [vmem:[#allocation8 + $0xc] sm:$0xf]
    %v430 = vld [vmem:[#allocation8 + $0x10] sm:$0xf]
    %v431 = vld [vmem:[#allocation8 + $0x14] sm:$0xf]
    %v432 = vld [vmem:[#allocation8 + $0x18] sm:$0xf]
    %v433 = vld [vmem:[#allocation8 + $0x1c] sm:$0xf]
    %v434 = vld [vmem:[#allocation8 + $0x20] sm:$0xf]
    %v435 = vld [vmem:[#allocation8 + $0x24] sm:$0xf]
    %v436 = vld [vmem:[#allocation8 + $0x28] sm:$0xf]
    %v437 = vld [vmem:[#allocation8 + $0x2c] sm:$0xf]
    %v438 = vld [vmem:[#allocation8 + $0x30] sm:$0xf]
    %v439 = vld [vmem:[#allocation8 + $0x34] sm:$0xf]
    %v440 = vld [vmem:[#allocation8 + $0x38] sm:$0xf]
    %v441 = vld [vmem:[#allocation8 + $0x3c] sm:$0xf]
    %v442 = vld [vmem:[#allocation8 + $0x40] sm:$0xf]
    %v443 = vld [vmem:[#allocation8 + $0x44] sm:$0xf]
    %v444 = vld [vmem:[#allocation8 + $0x48] sm:$0xf]
    %v445 = vld [vmem:[#allocation8 + $0x4c] sm:$0xf]
    %v446 = vld [vmem:[#allocation8 + $0x50] sm:$0xf]
    %v447 = vld [vmem:[#allocation8 + $0x54] sm:$0xf]
    %v448 = vld [vmem:[#allocation8 + $0x58] sm:$0xf]
    %v449 = vld [vmem:[#allocation8 + $0x5c] sm:$0xf]
    %v450 = vld [vmem:[#allocation8 + $0x60] sm:$0xf]
    %v451 = vld [vmem:[#allocation8 + $0x64] sm:$0xf]
    %v452 = vld [vmem:[#allocation8 + $0x68] sm:$0xf]
    %v453 = vld [vmem:[#allocation8 + $0x6c] sm:$0xf]
    %v454 = vld [vmem:[#allocation8 + $0x70] sm:$0xf]
    %v455 = vld [vmem:[#allocation8 + $0x74] sm:$0xf]
    %v456 = vld [vmem:[#allocation8 + $0x78] sm:$0xf]
    %v457 = vld [vmem:[#allocation8 + $0x7c] sm:$0xf]
    %v458 = vld [vmem:[%s6] sm:$0x1]
    %v460 = vlaneseq
    %v461 = vshrl.u32 %v460, 7
    %v462 = vsub.s32 0, %v461
    %v463 = vrot.slane %v458, %v462
    %v497 = vunpack.c.l.b16 %v426
    %v498 = vunpack.c.l.b16 %v427
    %v499 = vunpack.c.l.b16 %v428
    %v500 = vunpack.c.l.b16 %v429
    %v501 = vunpack.c.l.b16 %v430
    %v502 = vunpack.c.l.b16 %v431
    %v503 = vunpack.c.l.b16 %v432
    %v504 = vunpack.c.l.b16 %v433
    %v505 = vunpack.c.l.b16 %v434
    %v506 = vunpack.c.l.b16 %v435
    %v507 = vunpack.c.l.b16 %v436
    %v508 = vunpack.c.l.b16 %v437
    %v509 = vunpack.c.l.b16 %v438
    %v510 = vunpack.c.l.b16 %v439
    %v511 = vunpack.c.l.b16 %v440
    %v512 = vunpack.c.l.b16 %v441
    %v513 = vunpack.c.l.b16 %v442
    %v514 = vunpack.c.l.b16 %v443
    %v515 = vunpack.c.l.b16 %v444
    %v516 = vunpack.c.l.b16 %v445
    %v517 = vunpack.c.l.b16 %v446
    %v518 = vunpack.c.l.b16 %v447
    %v519 = vunpack.c.l.b16 %v448
    %v520 = vunpack.c.l.b16 %v449
    %v521 = vunpack.c.l.b16 %v450
    %v522 = vunpack.c.l.b16 %v451
    %v523 = vunpack.c.l.b16 %v452
    %v524 = vunpack.c.l.b16 %v453
    %v525 = vunpack.c.l.b16 %v454
    %v526 = vunpack.c.l.b16 %v455
    %v527 = vunpack.c.l.b16 %v456
    %v528 = vunpack.c.l.b16 %v457
    %v529 = vpack.c.b16 %v498, %v497
    %v530 = vpack.c.b16 %v500, %v499
    %v531 = vpack.c.b16 %v502, %v501
    %v532 = vpack.c.b16 %v504, %v503
    %v533 = vpack.c.b16 %v506, %v505
    %v534 = vpack.c.b16 %v508, %v507
    %v535 = vpack.c.b16 %v510, %v509
    %v536 = vpack.c.b16 %v512, %v511
    %v537 = vpack.c.b16 %v514, %v513
    %v538 = vpack.c.b16 %v516, %v515
    %v539 = vpack.c.b16 %v518, %v517
    %v540 = vpack.c.b16 %v520, %v519
    %v541 = vpack.c.b16 %v522, %v521
    %v542 = vpack.c.b16 %v524, %v523
    %v543 = vpack.c.b16 %v526, %v525
    %v544 = vpack.c.b16 %v528, %v527
    %561 = vmatprep.subr.bf16.mxu0 0
    %562 = vmatpush1.bf16.msra.mxu0 %v529
    %563 = vmatprep.subr.bf16.mxu0 0
    %564 = vmatpush1.bf16.msra.mxu0 %v530
    %565 = vmatprep.subr.bf16.mxu0 0
    %566 = vmatpush1.bf16.msra.mxu0 %v531
    %567 = vmatprep.subr.bf16.mxu0 0
    %568 = vmatpush1.bf16.msra.mxu0 %v532
    %569 = vmatprep.subr.bf16.mxu0 0
    %570 = vmatpush1.bf16.msra.mxu0 %v533
    %571 = vmatprep.subr.bf16.mxu0 0
    %572 = vmatpush1.bf16.msra.mxu0 %v534
    %573 = vmatprep.subr.bf16.mxu0 0
    %574 = vmatpush1.bf16.msra.mxu0 %v535
    %575 = vmatprep.subr.bf16.mxu0 0
    %576 = vmatpush1.bf16.msra.mxu0 %v536
    %577 = vmatprep.subr.bf16.mxu0 0
    %578 = vmatpush1.bf16.msra.mxu0 %v537
    %579 = vmatprep.subr.bf16.mxu0 0
    %580 = vmatpush1.bf16.msra.mxu0 %v538
    %581 = vmatprep.subr.bf16.mxu0 0
    %582 = vmatpush1.bf16.msra.mxu0 %v539
    %583 = vmatprep.subr.bf16.mxu0 0
    %584 = vmatpush1.bf16.msra.mxu0 %v540
    %585 = vmatprep.subr.bf16.mxu0 0
    %586 = vmatpush1.bf16.msra.mxu0 %v541
    %587 = vmatprep.subr.bf16.mxu0 0
    %588 = vmatpush1.bf16.msra.mxu0 %v542
    %589 = vmatprep.subr.bf16.mxu0 0
    %590 = vmatpush1.bf16.msra.mxu0 %v543
    %591 = vmatprep.subr.bf16.mxu0 0
    %592 = vmatpush1.bf16.msra.mxu0 %v544
    %593 = vmatprep.mubr.bf16.mxu0 %v425
    %594 = vmatmul.mubr.bf16.gmra.mrb[0].mxu0 %v424
    %v595 = vpop.f32.mrb[0].mxu0
    %v596 = vadd.f32 %v463, %v595
    %v597 = vpop.f32.mrb[0].mxu0
    %v598 = vpop.f32.mrb[0].mxu0
    %v599 = vadd.f32 %v463, %v598
    %v600 = vpop.f32.mrb[0].mxu0
    %601 = vdwg.mxu0
    %v602 = vld [vmem:[%s8] sm:$0xff]
    %v603 = vld [vmem:[%s8 + $0x8] sm:$0xff]
    %v604 = vlaneseq
    %v605 = vand.u32 %v604, 127
    %vm606 = vcmp.lt.s32.totalorder %v605, 4
    %v607 = vsel %vm606, %v596, -1e+30
    %v608 = vsel %vm606, %v599, -1e+30
    %609 = vmax.xlane.f32.xlu0 %v607
    %v610 = vpop.xlane.xlu0 %609
    %611 = vmax.xlane.f32.xlu0 %v608
    %v612 = vpop.xlane.xlu0 %611
    %v613 = vsub.f32 %v607, %v610
    %v614 = vsub.f32 %v608, %v612
    %v615 = vmul.f32 %v613, 1.442695
    %v616 = vpow.pop %v615
    %v617 = vmul.f32 %v614, 1.442695
    %v618 = vpow.pop %v617
    %619 = vadd.xlane.f32.xlu0 %v616
    %v620 = vpop.xlane.xlu0 %619
    %621 = vadd.xlane.f32.xlu0 %v618
    %v622 = vpop.xlane.xlu0 %621
    %v623 = vlog2.pop %v620
    %v624 = vmul.f32 %v623, 0.6931472
    %v625 = vlog2.pop %v622
    %v626 = vmul.f32 %v625, 0.6931472
    %v627 = vsub.f32 %v613, %v624
    %v628 = vsub.f32 %v614, %v626
    %v629 = vadd.f32 %v627, %v602
    %v630 = vadd.f32 %v628, %v603
    %631 = vmax.xlane.f32.xlu0 %v629
    %v632 = vpop.xlane.xlu0 %631
    %633 = vmax.xlane.f32.xlu0 %v630
    %v634 = vpop.xlane.xlu0 %633
    %vm635 = vcmp.ge.f32.partialorder %v629, %v632
    %vm636 = vcmp.ge.f32.partialorder %v630, %v634
    %v637 = vsel %vm635, %v605, 128
    %v638 = vsel %vm636, %v605, 128
    %v639 = vand.u32 %v637, 65535
    %v640 = vshra.s32 %v637, 16
    %v641 = vcvt.s32.f32 %v639
    %v642 = vcvt.s32.f32 %v640
    %643 = vmin.xlane.f32.xlu0 %v642
    %v644 = vpop.xlane.xlu0 %643
    %vm645 = vcmp.eq.f32.partialorder %v642, %v644
    %v646 = vsel %vm645, %v641, inf
    %647 = vmin.xlane.f32.xlu0 %v646
    %v648 = vpop.xlane.xlu0 %647
    %v649 = vcvt.f32.s32 %v648
    %v650 = vcvt.f32.s32 %v644
    %v651 = vshll.u32 %v650, 16
    %v652 = vadd.s32 %v651, %v649
    %v653 = vand.u32 %v638, 65535
    %v654 = vshra.s32 %v638, 16
    %v655 = vcvt.s32.f32 %v653
    %v656 = vcvt.s32.f32 %v654
    %657 = vmin.xlane.f32.xlu0 %v656
    %v658 = vpop.xlane.xlu0 %657
    %vm659 = vcmp.eq.f32.partialorder %v656, %v658
    %v660 = vsel %vm659, %v655, inf
    %661 = vmin.xlane.f32.xlu0 %v660
    %v662 = vpop.xlane.xlu0 %661
    %v663 = vcvt.f32.s32 %v662
    %v664 = vcvt.f32.s32 %v658
    %v665 = vshll.u32 %v664, 16
    %v666 = vadd.s32 %v665, %v663
    %vm667 = vcmp.eq.s32.totalorder %v605, %v652
    %vm668 = vcmp.eq.s32.totalorder %v605, %v666
    %v669 = vsel %vm667, %v627, 0.0
    %v670 = vsel %vm668, %v628, 0.0
    %671 = vadd.xlane.f32.xlu0 %v669
    %v672 = vpop.xlane.xlu0 %671
    %673 = vadd.xlane.f32.xlu0 %v670
    %v674 = vpop.xlane.xlu0 %673
    %vm675 = vcmp.ge.s32.totalorder %v605, 4
    %vm676 = vcmp.lt.s32.totalorder %v605, 8
    %vm677 = vmand %vm675, %vm676
    %v678 = vld [vmem:[%s7] sm:$0x1]
    %v680 = vlaneseq
    %v681 = vshrl.u32 %v680, 7
    %v682 = vsub.s32 0, %v681
    %v683 = vrot.slane %v678, %v682
    %v685 = vmul.f32 %v683, %v602
    %v686 = vmul.f32 %v683, %v603
    %v687 = vadd.f32 %v596, %v685
    %v688 = vadd.f32 %v599, %v686
    %v689 = vsel %vm677, %v687, 0.0
    %v690 = vsel %vm677, %v688, 0.0
    %v691 = vmul.f32 %v602, %v602
    %v692 = vmul.f32 %v603, %v603
    %v693 = vsel %vm677, %v691, 0.0
    %v694 = vsel %vm677, %v692, 0.0
    %vm695 = vcmp.eq.s32.totalorder %v605, 10
    %v696 = vsel %vm695, %v596, 0.0
    %v697 = vsel %vm695, %v599, 0.0
    %698 = vadd.xlane.f32.xlu0 %v696
    %v699 = vpop.xlane.xlu0 %698
    %700 = vadd.xlane.f32.xlu0 %v697
    %v701 = vpop.xlane.xlu0 %700
    %702 = vadd.xlane.f32.xlu0 %v693
    %v703 = vpop.xlane.xlu0 %702
    %704 = vadd.xlane.f32.xlu0 %v694
    %v705 = vpop.xlane.xlu0 %704
    %v706 = vmul.f32 %v703, 0.5
    %v707 = vmul.f32 %v705, 0.5
    %v708 = vsub.f32 %v699, %v706
    %v709 = vsub.f32 %v701, %v707
    %vm710 = vcmp.eq.s32.totalorder %v605, 8
    %v711 = vsel %vm710, %v596, 0.0
    %v712 = vsel %vm710, %v599, 0.0
    %713 = vadd.xlane.f32.xlu0 %v711
    %v714 = vpop.xlane.xlu0 %713
    %715 = vadd.xlane.f32.xlu0 %v712
    %v716 = vpop.xlane.xlu0 %715
    %v717 = vcvt.s32.f32 %v652
    %v718 = vcvt.s32.f32 %v666
    %v719 = vsel %vm710, %v717, %v689
    %v720 = vsel %vm710, %v718, %v690
    %vm721 = vcmp.eq.s32.totalorder %v605, 9
    %v722 = vsel %vm721, %v672, %v719
    %v723 = vsel %vm721, %v674, %v720
    %v724 = vsel %vm695, %v708, %v722
    %v725 = vsel %vm695, %v709, %v723
    %vm726 = vcmp.eq.s32.totalorder %v605, 11
    %v727 = vsel %vm726, %v714, %v724
    %v728 = vsel %vm726, %v716, %v725
    %729 = vst [vmem:[#allocation10] sm:$0xff] %v727
    %730 = vst [vmem:[#allocation10 + $0x8] sm:$0xff] %v728
    // Predicated region
    $region54: #{tpu_custom_call.1} parent=1 // pred_check
      _
    $region55: #{tpu_custom_call.1} parent=1 // pred_check_branch
      %732 = sbr.rel (0) target = $region57
    $region56: #{tpu_custom_call.1} parent=1 // pred_region
      %s734 = ssub.s32 256, 256
      %735 = vsyncadd [#allocation4], %s734
      %s736 = sshll.u32 [#allocation10], 4
      %s737 = int_to_ptr.vmem [resolvable:$true] %s736
      %742 = dma.vmem_to_hbm [thread:$0]  %s737, 256, %s9, [#allocation4], 128, 128, 8
    $region57: #{tpu_custom_call.1} parent=1 // pred_fallthru
      _
    // Predicated region
    $region58: #{tpu_custom_call.1} parent=1 // pred_check
      _
    $region59: #{tpu_custom_call.1} parent=1 // pred_check_branch
      %744 = sbr.rel (0) target = $region61
    $region60: #{tpu_custom_call.1} parent=1 // pred_region
      %745 = dma.done [#allocation4], 256
    $region61: #{tpu_custom_call.1} parent=1 // pred_fallthru
      _
    %746 = vsyncpa [#allocation3], 1
    %747 = vsyncpa [#allocation6], 1
    %748 = vsyncpa [#allocation9], 1
    %749 = vsyncpa [#allocation4], 1

</llo_original>
